<compile_context>
chip_gen: v7x
topology: tpu7x:2x2x1
jax: 0.10.0
libtpu: 0.0.40
codegen_flags: <defaults>
</compile_context>

<pallas_src>
import functools

import jax
import jax.numpy as jnp
from jax.experimental import pallas as pl
from jax.experimental.pallas import tpu as pltpu


def _round_up(x: int, m: int) -> int:
    return ((x + m - 1) // m) * m


def _ensemble_kernel(x_ref, wm_ref, bm_ref, gamma_ref, beta_ref,
                     wc_ref, bc_ref, out_ref, acc_ref, *, b_true: int):
    """Grid axis 0 tiles the D (flattened-image feature) reduction.

    x_ref    : [Bp, tk]   bf16  flattened-image tile (streams over D)
    wm_ref   : [tk, K]    bf16  stacked per-model weight tile (streams over D)
    bm_ref   : [1, K]     f32   stacked per-model biases            (resident)
    gamma_ref: [1, K]     f32   BatchNorm1d weight                  (resident)
    beta_ref : [1, K]     f32   BatchNorm1d bias                    (resident)
    wc_ref   : [K, Np]    f32   classifier weight (transposed)      (resident)
    bc_ref   : [1, Np]    f32   classifier bias                     (resident)
    out_ref  : [Bp, Np]   f32   lane-dense output
    acc_ref  : [Bp, K]    f32   VMEM scratch accumulator for `stacked`
    """
    k = pl.program_id(0)

    @pl.when(k == 0)
    def _init():
        acc_ref[...] = jnp.zeros_like(acc_ref)

    # Partial matmul over this D tile:  acc += x_tile @ Wm_tile  (bf16 -> f32 acc)
    acc_ref[...] += jnp.dot(x_ref[...], wm_ref[...],
                            preferred_element_type=jnp.float32)

    @pl.when(k == pl.num_programs(0) - 1)
    def _epilogue():
        # cat([model_i(x)], -1) == x @ Wm_T + bm ; then ReLU.
        stacked = jnp.maximum(acc_ref[...] + bm_ref[...], 0.0)

        # BatchNorm1d (training-mode: batch mean, biased var, eps=1e-5).
        # Padded batch rows must not contribute to the statistics.
        bp = stacked.shape[0]
        row_ids = jax.lax.broadcasted_iota(jnp.int32, (bp, 1), 0)
        row_mask = (row_ids < b_true).astype(jnp.float32)
        inv_b = 1.0 / float(b_true)

        mean = jnp.sum(stacked * row_mask, axis=0, keepdims=True) * inv_b
        centered = stacked - mean
        var = jnp.sum((centered * row_mask) ** 2, axis=0, keepdims=True) * inv_b
        inv_std = jax.lax.rsqrt(var + 1e-5)
        normed = centered * inv_std * gamma_ref[...] + beta_ref[...]

        # Final classifier head (tiny, f32); Np lane-padding columns of wc are
        # zero so the padded output columns are exact junk-free zeros + bc pad.
        out = jnp.dot(normed, wc_ref[...], preferred_element_type=jnp.float32)
        out_ref[...] = out + bc_ref[...]


def prepare_params(wm_t, bm, gamma, beta, wc_t, bc, *, tk_max: int = 4096):
    """One-time (model-load) cast/pad of the ensemble parameters.

    wm_t : [D, K]   D = C*H*W, K = n_models * n_classes   (pre-transposed)
    bm, gamma, beta : [1, K]
    wc_t : [K, N]   N = n_classes                          (pre-transposed)
    bc   : [1, N]
    """
    D, K = wm_t.shape
    N = wc_t.shape[1]

    tk = min(tk_max, _round_up(D, 256))     # D tile, 256-aligned (bf16 sublanes x lanes)
    Dp = _round_up(D, tk)
    Np = _round_up(N, 128)                  # lane-dense output / head columns only

    # Streamed MXU weight: bf16, K left UNPADDED (full-dim block is legal).
    wmp = jnp.pad(wm_t.astype(jnp.bfloat16), ((0, Dp - D), (0, 0)))     # [Dp, K]
    # Tiny f32 residents.
    bmp = bm.astype(jnp.float32).reshape(1, K)
    gp = gamma.astype(jnp.float32).reshape(1, K)
    btp = beta.astype(jnp.float32).reshape(1, K)
    wcp = jnp.pad(wc_t.astype(jnp.float32), ((0, 0), (0, Np - N)))      # [K, Np]
    bcp = jnp.pad(bc.astype(jnp.float32).reshape(1, N), ((0, 0), (0, Np - N)))

    meta = dict(D=D, K=K, N=N, tk=tk, Dp=Dp, Np=Np)
    return (wmp, bmp, gp, btp, wcp, bcp), meta


def ensemble_forward(x_nchw, params, meta):
    """Run the full ensemble forward as one Pallas kernel. Returns [B, N] f32."""
    wmp, bmp, gp, btp, wcp, bcp = params
    D, K, N = meta["D"], meta["K"], meta["N"]
    tk, Dp, Np = meta["tk"], meta["Dp"], meta["Np"]

    B = x_nchw.shape[0]
    Bp = _round_up(max(B, 16), 16)          # bf16 LHS: 16 sublanes per packed vreg

    # Per-call activation prep only (weights were padded/cast once).
    x_flat = x_nchw.reshape(B, -1).astype(jnp.bfloat16)
    xp = jnp.pad(x_flat, ((0, Bp - B), (0, Dp - D)))

    grid = (Dp // tk,)

    cost = pl.CostEstimate(
        flops=2 * B * D * K + 2 * B * K * N,
        transcendentals=K,                  # rsqrt per BN feature
        bytes_accessed=int(xp.size * 2 + wmp.size * 2 + Bp * Np * 4
                           + (bmp.size + gp.size + btp.size
                              + wcp.size + bcp.size) * 4),
    )

    kernel = functools.partial(_ensemble_kernel, b_true=B)

    out_padded = pl.pallas_call(
        kernel,
        out_shape=jax.ShapeDtypeStruct((Bp, Np), jnp.float32),
        grid_spec=pltpu.PrefetchScalarGridSpec(
            num_scalar_prefetch=0,
            grid=grid,
            in_specs=[
                pl.BlockSpec((Bp, tk), lambda k: (0, k)),   # x tile (streams over D)
                pl.BlockSpec((tk, K), lambda k: (k, 0)),    # wm tile (streams over D)
                pl.BlockSpec((1, K), lambda k: (0, 0)),     # bm     (VMEM resident)
                pl.BlockSpec((1, K), lambda k: (0, 0)),     # gamma  (VMEM resident)
                pl.BlockSpec((1, K), lambda k: (0, 0)),     # beta   (VMEM resident)
                pl.BlockSpec((K, Np), lambda k: (0, 0)),    # wc     (VMEM resident)
                pl.BlockSpec((1, Np), lambda k: (0, 0)),    # bc     (VMEM resident)
            ],
            out_specs=pl.BlockSpec((Bp, Np), lambda k: (0, 0)),
            scratch_shapes=[pltpu.VMEM((Bp, K), jnp.float32)],
        ),
        compiler_params=pltpu.CompilerParams(
            dimension_semantics=("arbitrary",),
            vmem_limit_bytes=32 * 1024 * 1024,   # safe on v5e/v6e (128 MiB) and v7x (64 MiB)
        ),
        cost_estimate=cost,
    )(xp, wmp, bmp, gp, btp, wcp, bcp)

    return out_padded[:B, :N]


def _reference(x_nchw, wm_t, bm, gamma, beta, wc_t, bc):
    """Pure-JAX reference with the same bf16 MXU-operand quantization."""
    B = x_nchw.shape[0]
    x = x_nchw.reshape(B, -1).astype(jnp.bfloat16).astype(jnp.float32)
    w = wm_t.astype(jnp.bfloat16).astype(jnp.float32)
    s = x @ w + bm
    s = jnp.maximum(s, 0.0)
    mean = jnp.mean(s, axis=0, keepdims=True)
    var = jnp.mean((s - mean) ** 2, axis=0, keepdims=True)
    s = (s - mean) * jax.lax.rsqrt(var + 1e-5) * gamma + beta
    return s @ wc_t + bc


if __name__ == "__main__":
    # Small shapes consistent with the module's forward.
    B, C, H, W = 2, 4, 16, 16          # NCHW image batch
    n_classes = 8
    n_models = 3
    D = C * H * W                       # 1024
    K = n_classes * n_models            # 24

    key = jax.random.PRNGKey(0)
    k_x, k_wm, k_bm, k_wc, k_bc, k_g, k_b = jax.random.split(key, 7)

    x = jax.random.normal(k_x, (B, C, H, W), dtype=jnp.float32)

    # Per-model linear classifiers stacked along the output (class) dim.
    wm_t = 0.05 * jax.random.normal(k_wm, (D, K), dtype=jnp.float32)   # [D, M*n_classes]
    bm = 0.1 * jax.random.normal(k_bm, (1, K), dtype=jnp.float32)

    # BatchNorm1d affine params (deterministic, non-trivial).
    gamma = 1.0 + 0.1 * jax.random.normal(k_g, (1, K), dtype=jnp.float32)
    beta = 0.1 * jax.random.normal(k_b, (1, K), dtype=jnp.float32)

    # Final classifier Linear(M*n_classes, n_classes).
    wc_t = 0.1 * jax.random.normal(k_wc, (K, n_classes), dtype=jnp.float32)
    bc = 0.1 * jax.random.normal(k_bc, (1, n_classes), dtype=jnp.float32)

    # One-time parameter prep (hoisted out of the per-call path).
    params, meta = prepare_params(wm_t, bm, gamma, beta, wc_t, bc)
    params = jax.block_until_ready(params)

    out = ensemble_forward(x, params, meta)
    out = jax.block_until_ready(out)

    ref = _reference(x, wm_t, bm, gamma, beta, wc_t, bc)
    assert out.shape == (B, n_classes)
    # NOTE: bf16 quantization of x/Wm + training-mode BN at B=2 amplifies rounding;
    # 1e-2 tolerance documented as acceptable for this use case.
    assert jnp.allclose(out, ref, atol=1e-2, rtol=1e-2), "mismatch vs reference"

    print("KERNEL_OK")
</pallas_src>

<mosaic_0001>
module attributes {stable_mosaic.version = 11 : i64} {
  func.func @_ensemble_kernel(%arg0: i32, %arg1: memref<16x1024xbf16, #tpu.memory_space<vmem>>, %arg2: memref<1024x24xbf16, #tpu.memory_space<vmem>>, %arg3: memref<1x24xf32, #tpu.memory_space<vmem>>, %arg4: memref<1x24xf32, #tpu.memory_space<vmem>>, %arg5: memref<1x24xf32, #tpu.memory_space<vmem>>, %arg6: memref<24x128xf32, #tpu.memory_space<vmem>>, %arg7: memref<1x128xf32, #tpu.memory_space<vmem>>, %arg8: memref<16x128xf32, #tpu.memory_space<vmem>>, %arg9: memref<16x24xf32, #tpu.memory_space<vmem>>) attributes {dimension_semantics = [#tpu.dimension_semantics<arbitrary>], iteration_bounds = array<i64: 1>, scalar_prefetch = 0 : i64, scratch_operands = 1 : i64, tpu.core_type = #tpu.core_type<tc>, window_params = [{transform_indices = @transform_0, window_bounds = array<i64: 16, 1024>}, {transform_indices = @transform_1, window_bounds = array<i64: 1024, 24>}, {pipeline_mode = #tpu.pipeline_mode<synchronous>, transform_indices = @transform_2, window_bounds = array<i64: 1, 24>}, {pipeline_mode = #tpu.pipeline_mode<synchronous>, transform_indices = @transform_3, window_bounds = array<i64: 1, 24>}, {pipeline_mode = #tpu.pipeline_mode<synchronous>, transform_indices = @transform_4, window_bounds = array<i64: 1, 24>}, {pipeline_mode = #tpu.pipeline_mode<synchronous>, transform_indices = @transform_5, window_bounds = array<i64: 24, 128>}, {pipeline_mode = #tpu.pipeline_mode<synchronous>, transform_indices = @transform_6, window_bounds = array<i64: 1, 128>}, {pipeline_mode = #tpu.pipeline_mode<synchronous>, transform_indices = @transform_7, window_bounds = array<i64: 16, 128>}]} {
    %c0_i32 = arith.constant 0 : i32
    %0 = arith.cmpi eq, %arg0, %c0_i32 : i32
    %1 = arith.extui %0 : i1 to i32
    %c0_i32_0 = arith.constant 0 : i32
    %2 = arith.cmpi ne, %1, %c0_i32_0 : i32
    scf.if %2 {
      %cst_10 = arith.constant 0.000000e+00 : f32
      %12 = vector.broadcast %cst_10 : f32 to vector<16x24xf32>
      %c0_11 = arith.constant 0 : index
      %c0_12 = arith.constant 0 : index
      %13 = vector.load %arg9[%c0_11, %c0_12] : memref<16x24xf32, #tpu.memory_space<vmem>>, vector<16x24xf32>
      tpu.vector_store %arg9[%c0_11, %c0_12], %12 {strides = array<i32>} : memref<16x24xf32, #tpu.memory_space<vmem>>, vector<16x24xf32>,
    } else {
    }
    %c0 = arith.constant 0 : index
    %c0_1 = arith.constant 0 : index
    %3 = vector.load %arg9[%c0, %c0_1] : memref<16x24xf32, #tpu.memory_space<vmem>>, vector<16x24xf32>
    %c0_2 = arith.constant 0 : index
    %c0_3 = arith.constant 0 : index
    %4 = vector.load %arg1[%c0_2, %c0_3] : memref<16x1024xbf16, #tpu.memory_space<vmem>>, vector<16x1024xbf16>
    %c0_4 = arith.constant 0 : index
    %c0_5 = arith.constant 0 : index
    %5 = vector.load %arg2[%c0_4, %c0_5] : memref<1024x24xbf16, #tpu.memory_space<vmem>>, vector<1024x24xbf16>
    %cst = arith.constant dense<0.000000e+00> : vector<16x24xf32>
    %6 = tpu.matmul %4, %5, %cst {dimension_numbers = #tpu.dot_dimension_numbers<[1], [0], [0], [1], [0, 0, 1, 1], [], []>} : vector<16x1024xbf16>, vector<1024x24xbf16>, vector<16x24xf32> -> vector<16x24xf32>
    %7 = arith.addf %3, %6 : vector<16x24xf32>
    %c0_6 = arith.constant 0 : index
    %c0_7 = arith.constant 0 : index
    %8 = vector.load %arg9[%c0_6, %c0_7] : memref<16x24xf32, #tpu.memory_space<vmem>>, vector<16x24xf32>
    tpu.vector_store %arg9[%c0_6, %c0_7], %7 {strides = array<i32>} : memref<16x24xf32, #tpu.memory_space<vmem>>, vector<16x24xf32>,
    %c0_i32_8 = arith.constant 0 : i32
    %9 = arith.cmpi eq, %arg0, %c0_i32_8 : i32
    %10 = arith.extui %9 : i1 to i32
    %c0_i32_9 = arith.constant 0 : i32
    %11 = arith.cmpi ne, %10, %c0_i32_9 : i32
    scf.if %11 {
      %c0_10 = arith.constant 0 : index
      %c0_11 = arith.constant 0 : index
      %12 = vector.load %arg9[%c0_10, %c0_11] : memref<16x24xf32, #tpu.memory_space<vmem>>, vector<16x24xf32>
      %c0_12 = arith.constant 0 : index
      %c0_13 = arith.constant 0 : index
      %13 = vector.load %arg3[%c0_12, %c0_13] : memref<1x24xf32, #tpu.memory_space<vmem>>, vector<1x24xf32>
      %14 = vector.broadcast %13 : vector<1x24xf32> to vector<16x24xf32>
      %15 = arith.addf %12, %14 : vector<16x24xf32>
      %cst_14 = arith.constant 0.000000e+00 : f32
      %16 = vector.broadcast %cst_14 : f32 to vector<16x24xf32>
      %17 = arith.maximumf %15, %16 : vector<16x24xf32>
      %18 = tpu.iota {dimensions = array<i32: 0>} : vector<16x1xi32>
      %c2_i32 = arith.constant 2 : i32
      %19 = vector.broadcast %c2_i32 : i32 to vector<16x1xi32>
      %20 = arith.cmpi slt, %18, %19 : vector<16x1xi32>
      %21 = arith.extui %20 : vector<16x1xi1> to vector<16x1xi32>
      %22 = arith.sitofp %21 : vector<16x1xi32> to vector<16x1xf32>
      %23 = vector.broadcast %22 : vector<16x1xf32> to vector<16x24xf32>
      %24 = arith.mulf %17, %23 : vector<16x24xf32>
      %cst_15 = arith.constant dense<0.000000e+00> : vector<24xf32>
      %25 = vector.multi_reduction <add>, %24, %cst_15 [0] : vector<16x24xf32> to vector<24xf32>
      %26 = vector.shape_cast %25 : vector<24xf32> to vector<1x24xf32>
      %cst_16 = arith.constant 5.000000e-01 : f32
      %27 = vector.broadcast %cst_16 : f32 to vector<1x24xf32>
      %28 = arith.mulf %26, %27 : vector<1x24xf32>
      %29 = vector.broadcast %28 : vector<1x24xf32> to vector<16x24xf32>
      %30 = arith.subf %17, %29 : vector<16x24xf32>
      %31 = vector.broadcast %22 : vector<16x1xf32> to vector<16x24xf32>
      %32 = arith.mulf %30, %31 : vector<16x24xf32>
      %33 = arith.mulf %32, %32 : vector<16x24xf32>
      %cst_17 = arith.constant dense<0.000000e+00> : vector<24xf32>
      %34 = vector.multi_reduction <add>, %33, %cst_17 [0] : vector<16x24xf32> to vector<24xf32>
      %35 = vector.shape_cast %34 : vector<24xf32> to vector<1x24xf32>
      %cst_18 = arith.constant 5.000000e-01 : f32
      %36 = vector.broadcast %cst_18 : f32 to vector<1x24xf32>
      %37 = arith.mulf %35, %36 : vector<1x24xf32>
      %cst_19 = arith.constant 9.99999974E-6 : f32
      %38 = vector.broadcast %cst_19 : f32 to vector<1x24xf32>
      %39 = arith.addf %37, %38 : vector<1x24xf32>
      %40 = math.rsqrt %39 : vector<1x24xf32>
      %41 = vector.broadcast %40 : vector<1x24xf32> to vector<16x24xf32>
      %42 = arith.mulf %30, %41 : vector<16x24xf32>
      %c0_20 = arith.constant 0 : index
      %c0_21 = arith.constant 0 : index
      %43 = vector.load %arg4[%c0_20, %c0_21] : memref<1x24xf32, #tpu.memory_space<vmem>>, vector<1x24xf32>
      %44 = vector.broadcast %43 : vector<1x24xf32> to vector<16x24xf32>
      %45 = arith.mulf %42, %44 : vector<16x24xf32>
      %c0_22 = arith.constant 0 : index
      %c0_23 = arith.constant 0 : index
      %46 = vector.load %arg5[%c0_22, %c0_23] : memref<1x24xf32, #tpu.memory_space<vmem>>, vector<1x24xf32>
      %47 = vector.broadcast %46 : vector<1x24xf32> to vector<16x24xf32>
      %48 = arith.addf %45, %47 : vector<16x24xf32>
      %c0_24 = arith.constant 0 : index
      %c0_25 = arith.constant 0 : index
      %49 = vector.load %arg6[%c0_24, %c0_25] : memref<24x128xf32, #tpu.memory_space<vmem>>, vector<24x128xf32>
      %cst_26 = arith.constant dense<0.000000e+00> : vector<16x128xf32>
      %50 = tpu.matmul %48, %49, %cst_26 {dimension_numbers = #tpu.dot_dimension_numbers<[1], [0], [0], [1], [0, 0, 1, 1], [], []>} : vector<16x24xf32>, vector<24x128xf32>, vector<16x128xf32> -> vector<16x128xf32>
      %c0_27 = arith.constant 0 : index
      %c0_28 = arith.constant 0 : index
      %51 = vector.load %arg7[%c0_27, %c0_28] : memref<1x128xf32, #tpu.memory_space<vmem>>, vector<1x128xf32>
      %52 = vector.broadcast %51 : vector<1x128xf32> to vector<16x128xf32>
      %53 = arith.addf %50, %52 : vector<16x128xf32>
      %c0_29 = arith.constant 0 : index
      %c0_30 = arith.constant 0 : index
      %54 = vector.load %arg8[%c0_29, %c0_30] : memref<16x128xf32, #tpu.memory_space<vmem>>, vector<16x128xf32>
      tpu.vector_store %arg8[%c0_29, %c0_30], %53 {strides = array<i32>} : memref<16x128xf32, #tpu.memory_space<vmem>>, vector<16x128xf32>,
    } else {
    }
    return
  }
  func.func @transform_0(%arg0: i32) -> (i32, i32) {
    %c0_i32 = arith.constant 0 : i32
    %c0_i32_0 = arith.constant 0 : i32
    return %c0_i32, %arg0 : i32, i32
  }
  func.func @transform_1(%arg0: i32) -> (i32, i32) {
    %c0_i32 = arith.constant 0 : i32
    %c0_i32_0 = arith.constant 0 : i32
    return %arg0, %c0_i32 : i32, i32
  }
  func.func @transform_2(%arg0: i32) -> (i32, i32) {
    %c0_i32 = arith.constant 0 : i32
    %c0_i32_0 = arith.constant 0 : i32
    %c0_i32_1 = arith.constant 0 : i32
    return %c0_i32, %c0_i32_0 : i32, i32
  }
  func.func @transform_3(%arg0: i32) -> (i32, i32) {
    %c0_i32 = arith.constant 0 : i32
    %c0_i32_0 = arith.constant 0 : i32
    %c0_i32_1 = arith.constant 0 : i32
    return %c0_i32, %c0_i32_0 : i32, i32
  }
  func.func @transform_4(%arg0: i32) -> (i32, i32) {
    %c0_i32 = arith.constant 0 : i32
    %c0_i32_0 = arith.constant 0 : i32
    %c0_i32_1 = arith.constant 0 : i32
    return %c0_i32, %c0_i32_0 : i32, i32
  }
  func.func @transform_5(%arg0: i32) -> (i32, i32) {
    %c0_i32 = arith.constant 0 : i32
    %c0_i32_0 = arith.constant 0 : i32
    %c0_i32_1 = arith.constant 0 : i32
    return %c0_i32, %c0_i32_0 : i32, i32
  }
  func.func @transform_6(%arg0: i32) -> (i32, i32) {
    %c0_i32 = arith.constant 0 : i32
    %c0_i32_0 = arith.constant 0 : i32
    %c0_i32_1 = arith.constant 0 : i32
    return %c0_i32, %c0_i32_0 : i32, i32
  }
  func.func @transform_7(%arg0: i32) -> (i32, i32) {
    %c0_i32 = arith.constant 0 : i32
    %c0_i32_0 = arith.constant 0 : i32
    %c0_i32_1 = arith.constant 0 : i32
    return %c0_i32, %c0_i32_0 : i32, i32
  }
}

</mosaic_0001>

<llo_original>
// kernel: tpu_custom_call.1
$region0: #{tpu_custom_call.1}
  #allocation0 [shape = 'u32[]', space=smem, size = 0x4, offset = 0x4, fixed_abs, tag = 'smem constant byte address 0x4 - core index']
  #allocation1 [shape = 'u32[144,128]{1,0:T(1,128)}', space=vmem, size = 0x12000, scoped, tag = 'internal scratch']
  #allocation2 [shape = 'f32[16,24]{1,0:T(8,128)}', space=vmem, size = 0x2000, scoped, tag = 'scratch operand']
  %s0 = inlined_call_operand.vmem [shape: bf16[16,1024], index: 0, kind: input, shape index: {}]
  %s1 = inlined_call_operand.vmem [shape: bf16[1024,24], index: 1, kind: input, shape index: {}]
  %s2 = inlined_call_operand.vmem [shape: f32[1,24], index: 2, kind: input, shape index: {}]
  %s3 = inlined_call_operand.vmem [shape: f32[1,24], index: 3, kind: input, shape index: {}]
  %s4 = inlined_call_operand.vmem [shape: f32[1,24], index: 4, kind: input, shape index: {}]
  %s5 = inlined_call_operand.vmem [shape: f32[24,128], index: 5, kind: input, shape index: {}]
  %s6 = inlined_call_operand.vmem [shape: f32[1,128], index: 6, kind: input, shape index: {}]
  %s7 = inlined_call_operand.hbm [shape: f32[16,128], index: 7, kind: output, shape index: {}]
  %s8 = sld [smem:[#allocation0]]
  $region46: #{tpu_custom_call.1} parent=0
    _
  %s10 = ssub.s32 1, %s8
  %s11 = scalar_select 0, %s10, %s8
  $region1: #{tpu_custom_call.1} parent=0
    #allocation3 [shape = 'u8[8192]{0}', space=vmem, size = 0x2000, scoped, tag = 'output window, operand 0, single buffered']
    #allocation4 [shape = 's32[1]{0}', space=sflag, size = 0x4, scoped, tag = 'scoped memory for tpu_custom_call.1']
    %12 = vsyncpa [#allocation4], 0
    // Predicated region
    $region2: #{tpu_custom_call.1} parent=1 // pred_check
      _
    $region3: #{tpu_custom_call.1} parent=1 // pred_check_branch
      %14 = sbr.rel (0) target = $region5
    $region4: #{tpu_custom_call.1} parent=1 // pred_region
      _
    $region5: #{tpu_custom_call.1} parent=1 // pred_fallthru
      _
    // Predicated region
    $region6: #{tpu_custom_call.1} parent=1 // pred_check
      _
    $region7: #{tpu_custom_call.1} parent=1 // pred_check_branch
      %16 = sbr.rel (0) target = $region9
    $region8: #{tpu_custom_call.1} parent=1 // pred_region
      _
    $region9: #{tpu_custom_call.1} parent=1 // pred_fallthru
      _
    // Predicated region
    $region10: #{tpu_custom_call.1} parent=1 // pred_check
      _
    $region11: #{tpu_custom_call.1} parent=1 // pred_check_branch
      %18 = sbr.rel (0) target = $region13
    $region12: #{tpu_custom_call.1} parent=1 // pred_region
      _
    $region13: #{tpu_custom_call.1} parent=1 // pred_fallthru
      _
    // Predicated region
    $region14: #{tpu_custom_call.1} parent=1 // pred_check
      _
    $region15: #{tpu_custom_call.1} parent=1 // pred_check_branch
      %20 = sbr.rel (0) target = $region17
    $region16: #{tpu_custom_call.1} parent=1 // pred_region
      _
    $region17: #{tpu_custom_call.1} parent=1 // pred_fallthru
      _
    // Predicated region
    $region18: #{tpu_custom_call.1} parent=1 // pred_check
      _
    $region19: #{tpu_custom_call.1} parent=1 // pred_check_branch
      %22 = sbr.rel (0) target = $region21
    $region20: #{tpu_custom_call.1} parent=1 // pred_region
      _
    $region21: #{tpu_custom_call.1} parent=1 // pred_fallthru
      _
    // Predicated region
    $region22: #{tpu_custom_call.1} parent=1 // pred_check
      _
    $region23: #{tpu_custom_call.1} parent=1 // pred_check_branch
      %24 = sbr.rel (0) target = $region25
    $region24: #{tpu_custom_call.1} parent=1 // pred_region
      _
    $region25: #{tpu_custom_call.1} parent=1 // pred_fallthru
      _
    // Predicated region
    $region26: #{tpu_custom_call.1} parent=1 // pred_check
      _
    $region27: #{tpu_custom_call.1} parent=1 // pred_check_branch
      %26 = sbr.rel (0) target = $region29
    $region28: #{tpu_custom_call.1} parent=1 // pred_region
      _
    $region29: #{tpu_custom_call.1} parent=1 // pred_fallthru
      _
    %p28 = scmp.eq.s32.totalorder 0, 0
    // Predicated region
    $region30: #{tpu_custom_call.1} parent=1 // pred_check
      %p29 = pneg %p28
    $region31: #{tpu_custom_call.1} parent=1 // pred_check_branch
      %31 = sbr.rel (%p29) target = $region33
    $region32: #{tpu_custom_call.1} parent=1 // pred_region
      %vm32 = vcmask 195584
      %33 = vst.msk [vmem:[#allocation2] sm:$0xff] %vm32, 0.0
      %34 = vst.msk [vmem:[#allocation2 + $0x8] sm:$0xff] %vm32, 0.0
    $region33: #{tpu_custom_call.1} parent=1 // pred_fallthru
      _
    %v35 = vld [vmem:[#allocation2] sm:$0xff]
    %v36 = vld [vmem:[#allocation2 + $0x8] sm:$0xff]
    %v37 = vld [vmem:[%s0] sm:$0xff]
    %v38 = vld [vmem:[%s0 + $0x8] sm:$0xff]
    %v39 = vld [vmem:[%s0 + $0x10] sm:$0xff]
    %v40 = vld [vmem:[%s0 + $0x18] sm:$0xff]
    %v41 = vld [vmem:[%s0 + $0x20] sm:$0xff]
    %v42 = vld [vmem:[%s0 + $0x28] sm:$0xff]
    %v43 = vld [vmem:[%s0 + $0x30] sm:$0xff]
    %v44 = vld [vmem:[%s0 + $0x38] sm:$0xff]
    %v45 = vld [vmem:[%s1] sm:$0xf]
    %v46 = vld [vmem:[%s1 + $0x4] sm:$0xf]
    %v47 = vld [vmem:[%s1 + $0x8] sm:$0xf]
    %v48 = vld [vmem:[%s1 + $0xc] sm:$0xf]
    %v49 = vld [vmem:[%s1 + $0x10] sm:$0xf]
    %v50 = vld [vmem:[%s1 + $0x14] sm:$0xf]
    %v51 = vld [vmem:[%s1 + $0x18] sm:$0xf]
    %v52 = vld [vmem:[%s1 + $0x1c] sm:$0xf]
    %v53 = vld [vmem:[%s1 + $0x20] sm:$0xf]
    %v54 = vld [vmem:[%s1 + $0x24] sm:$0xf]
    %v55 = vld [vmem:[%s1 + $0x28] sm:$0xf]
    %v56 = vld [vmem:[%s1 + $0x2c] sm:$0xf]
    %v57 = vld [vmem:[%s1 + $0x30] sm:$0xf]
    %v58 = vld [vmem:[%s1 + $0x34] sm:$0xf]
    %v59 = vld [vmem:[%s1 + $0x38] sm:$0xf]
    %v60 = vld [vmem:[%s1 + $0x3c] sm:$0xf]
    %v61 = vld [vmem:[%s1 + $0x40] sm:$0xf]
    %v62 = vld [vmem:[%s1 + $0x44] sm:$0xf]
    %v63 = vld [vmem:[%s1 + $0x48] sm:$0xf]
    %v64 = vld [vmem:[%s1 + $0x4c] sm:$0xf]
    %v65 = vld [vmem:[%s1 + $0x50] sm:$0xf]
    %v66 = vld [vmem:[%s1 + $0x54] sm:$0xf]
    %v67 = vld [vmem:[%s1 + $0x58] sm:$0xf]
    %v68 = vld [vmem:[%s1 + $0x5c] sm:$0xf]
    %v69 = vld [vmem:[%s1 + $0x60] sm:$0xf]
    %v70 = vld [vmem:[%s1 + $0x64] sm:$0xf]
    %v71 = vld [vmem:[%s1 + $0x68] sm:$0xf]
    %v72 = vld [vmem:[%s1 + $0x6c] sm:$0xf]
    %v73 = vld [vmem:[%s1 + $0x70] sm:$0xf]
    %v74 = vld [vmem:[%s1 + $0x74] sm:$0xf]
    %v75 = vld [vmem:[%s1 + $0x78] sm:$0xf]
    %v76 = vld [vmem:[%s1 + $0x7c] sm:$0xf]
    %v77 = vld [vmem:[%s1 + $0x80] sm:$0xf]
    %v78 = vld [vmem:[%s1 + $0x84] sm:$0xf]
    %v79 = vld [vmem:[%s1 + $0x88] sm:$0xf]
    %v80 = vld [vmem:[%s1 + $0x8c] sm:$0xf]
    %v81 = vld [vmem:[%s1 + $0x90] sm:$0xf]
    %v82 = vld [vmem:[%s1 + $0x94] sm:$0xf]
    %v83 = vld [vmem:[%s1 + $0x98] sm:$0xf]
    %v84 = vld [vmem:[%s1 + $0x9c] sm:$0xf]
    %v85 = vld [vmem:[%s1 + $0xa0] sm:$0xf]
    %v86 = vld [vmem:[%s1 + $0xa4] sm:$0xf]
    %v87 = vld [vmem:[%s1 + $0xa8] sm:$0xf]
    %v88 = vld [vmem:[%s1 + $0xac] sm:$0xf]
    %v89 = vld [vmem:[%s1 + $0xb0] sm:$0xf]
    %v90 = vld [vmem:[%s1 + $0xb4] sm:$0xf]
    %v91 = vld [vmem:[%s1 + $0xb8] sm:$0xf]
    %v92 = vld [vmem:[%s1 + $0xbc] sm:$0xf]
    %v93 = vld [vmem:[%s1 + $0xc0] sm:$0xf]
    %v94 = vld [vmem:[%s1 + $0xc4] sm:$0xf]
    %v95 = vld [vmem:[%s1 + $0xc8] sm:$0xf]
    %v96 = vld [vmem:[%s1 + $0xcc] sm:$0xf]
    %v97 = vld [vmem:[%s1 + $0xd0] sm:$0xf]
    %v98 = vld [vmem:[%s1 + $0xd4] sm:$0xf]
    %v99 = vld [vmem:[%s1 + $0xd8] sm:$0xf]
    %v100 = vld [vmem:[%s1 + $0xdc] sm:$0xf]
    %v101 = vld [vmem:[%s1 + $0xe0] sm:$0xf]
    %v102 = vld [vmem:[%s1 + $0xe4] sm:$0xf]
    %v103 = vld [vmem:[%s1 + $0xe8] sm:$0xf]
    %v104 = vld [vmem:[%s1 + $0xec] sm:$0xf]
    %v105 = vld [vmem:[%s1 + $0xf0] sm:$0xf]
    %v106 = vld [vmem:[%s1 + $0xf4] sm:$0xf]
    %v107 = vld [vmem:[%s1 + $0xf8] sm:$0xf]
    %v108 = vld [vmem:[%s1 + $0xfc] sm:$0xf]
    %v109 = vld [vmem:[%s1 + $0x100] sm:$0xf]
    %v110 = vld [vmem:[%s1 + $0x104] sm:$0xf]
    %v111 = vld [vmem:[%s1 + $0x108] sm:$0xf]
    %v112 = vld [vmem:[%s1 + $0x10c] sm:$0xf]
    %v113 = vld [vmem:[%s1 + $0x110] sm:$0xf]
    %v114 = vld [vmem:[%s1 + $0x114] sm:$0xf]
    %v115 = vld [vmem:[%s1 + $0x118] sm:$0xf]
    %v116 = vld [vmem:[%s1 + $0x11c] sm:$0xf]
    %v117 = vld [vmem:[%s1 + $0x120] sm:$0xf]
    %v118 = vld [vmem:[%s1 + $0x124] sm:$0xf]
    %v119 = vld [vmem:[%s1 + $0x128] sm:$0xf]
    %v120 = vld [vmem:[%s1 + $0x12c] sm:$0xf]
    %v121 = vld [vmem:[%s1 + $0x130] sm:$0xf]
    %v122 = vld [vmem:[%s1 + $0x134] sm:$0xf]
    %v123 = vld [vmem:[%s1 + $0x138] sm:$0xf]
    %v124 = vld [vmem:[%s1 + $0x13c] sm:$0xf]
    %v125 = vld [vmem:[%s1 + $0x140] sm:$0xf]
    %v126 = vld [vmem:[%s1 + $0x144] sm:$0xf]
    %v127 = vld [vmem:[%s1 + $0x148] sm:$0xf]
    %v128 = vld [vmem:[%s1 + $0x14c] sm:$0xf]
    %v129 = vld [vmem:[%s1 + $0x150] sm:$0xf]
    %v130 = vld [vmem:[%s1 + $0x154] sm:$0xf]
    %v131 = vld [vmem:[%s1 + $0x158] sm:$0xf]
    %v132 = vld [vmem:[%s1 + $0x15c] sm:$0xf]
    %v133 = vld [vmem:[%s1 + $0x160] sm:$0xf]
    %v134 = vld [vmem:[%s1 + $0x164] sm:$0xf]
    %v135 = vld [vmem:[%s1 + $0x168] sm:$0xf]
    %v136 = vld [vmem:[%s1 + $0x16c] sm:$0xf]
    %v137 = vld [vmem:[%s1 + $0x170] sm:$0xf]
    %v138 = vld [vmem:[%s1 + $0x174] sm:$0xf]
    %v139 = vld [vmem:[%s1 + $0x178] sm:$0xf]
    %v140 = vld [vmem:[%s1 + $0x17c] sm:$0xf]
    %v141 = vld [vmem:[%s1 + $0x180] sm:$0xf]
    %v142 = vld [vmem:[%s1 + $0x184] sm:$0xf]
    %v143 = vld [vmem:[%s1 + $0x188] sm:$0xf]
    %v144 = vld [vmem:[%s1 + $0x18c] sm:$0xf]
    %v145 = vld [vmem:[%s1 + $0x190] sm:$0xf]
    %v146 = vld [vmem:[%s1 + $0x194] sm:$0xf]
    %v147 = vld [vmem:[%s1 + $0x198] sm:$0xf]
    %v148 = vld [vmem:[%s1 + $0x19c] sm:$0xf]
    %v149 = vld [vmem:[%s1 + $0x1a0] sm:$0xf]
    %v150 = vld [vmem:[%s1 + $0x1a4] sm:$0xf]
    %v151 = vld [vmem:[%s1 + $0x1a8] sm:$0xf]
    %v152 = vld [vmem:[%s1 + $0x1ac] sm:$0xf]
    %v153 = vld [vmem:[%s1 + $0x1b0] sm:$0xf]
    %v154 = vld [vmem:[%s1 + $0x1b4] sm:$0xf]
    %v155 = vld [vmem:[%s1 + $0x1b8] sm:$0xf]
    %v156 = vld [vmem:[%s1 + $0x1bc] sm:$0xf]
    %v157 = vld [vmem:[%s1 + $0x1c0] sm:$0xf]
    %v158 = vld [vmem:[%s1 + $0x1c4] sm:$0xf]
    %v159 = vld [vmem:[%s1 + $0x1c8] sm:$0xf]
    %v160 = vld [vmem:[%s1 + $0x1cc] sm:$0xf]
    %v161 = vld [vmem:[%s1 + $0x1d0] sm:$0xf]
    %v162 = vld [vmem:[%s1 + $0x1d4] sm:$0xf]
    %v163 = vld [vmem:[%s1 + $0x1d8] sm:$0xf]
    %v164 = vld [vmem:[%s1 + $0x1dc] sm:$0xf]
    %v165 = vld [vmem:[%s1 + $0x1e0] sm:$0xf]
    %v166 = vld [vmem:[%s1 + $0x1e4] sm:$0xf]
    %v167 = vld [vmem:[%s1 + $0x1e8] sm:$0xf]
    %v168 = vld [vmem:[%s1 + $0x1ec] sm:$0xf]
    %v169 = vld [vmem:[%s1 + $0x1f0] sm:$0xf]
    %v170 = vld [vmem:[%s1 + $0x1f4] sm:$0xf]
    %v171 = vld [vmem:[%s1 + $0x1f8] sm:$0xf]
    %v172 = vld [vmem:[%s1 + $0x1fc] sm:$0xf]
    %v181 = vunpack.c.l.b16 %v37
    %v182 = vunpack.c.h.b16 %v37
    %v183 = vunpack.c.l.b16 %v38
    %v184 = vunpack.c.h.b16 %v38
    %v185 = vunpack.c.l.b16 %v39
    %v186 = vunpack.c.h.b16 %v39
    %v187 = vunpack.c.l.b16 %v40
    %v188 = vunpack.c.h.b16 %v40
    %v189 = vunpack.c.l.b16 %v41
    %v190 = vunpack.c.h.b16 %v41
    %v191 = vunpack.c.l.b16 %v42
    %v192 = vunpack.c.h.b16 %v42
    %v193 = vunpack.c.l.b16 %v43
    %v194 = vunpack.c.h.b16 %v43
    %v195 = vunpack.c.l.b16 %v44
    %v196 = vunpack.c.h.b16 %v44
    %v197 = vpack.c.b16 %v189, %v181
    %v198 = vpack.c.b16 %v190, %v182
    %v199 = vpack.c.b16 %v191, %v183
    %v200 = vpack.c.b16 %v192, %v184
    %v201 = vpack.c.b16 %v193, %v185
    %v202 = vpack.c.b16 %v194, %v186
    %v203 = vpack.c.b16 %v195, %v187
    %v204 = vpack.c.b16 %v196, %v188
    %v341 = vunpack.c.l.b16 %v45
    %v342 = vunpack.c.l.b16 %v46
    %v343 = vunpack.c.l.b16 %v47
    %v344 = vunpack.c.l.b16 %v48
    %v345 = vunpack.c.l.b16 %v49
    %v346 = vunpack.c.l.b16 %v50
    %v347 = vunpack.c.l.b16 %v51
    %v348 = vunpack.c.l.b16 %v52
    %v349 = vunpack.c.l.b16 %v53
    %v350 = vunpack.c.l.b16 %v54
    %v351 = vunpack.c.l.b16 %v55
    %v352 = vunpack.c.l.b16 %v56
    %v353 = vunpack.c.l.b16 %v57
    %v354 = vunpack.c.l.b16 %v58
    %v355 = vunpack.c.l.b16 %v59
    %v356 = vunpack.c.l.b16 %v60
    %v357 = vunpack.c.l.b16 %v61
    %v358 = vunpack.c.l.b16 %v62
    %v359 = vunpack.c.l.b16 %v63
    %v360 = vunpack.c.l.b16 %v64
    %v361 = vunpack.c.l.b16 %v65
    %v362 = vunpack.c.l.b16 %v66
    %v363 = vunpack.c.l.b16 %v67
    %v364 = vunpack.c.l.b16 %v68
    %v365 = vunpack.c.l.b16 %v69
    %v366 = vunpack.c.l.b16 %v70
    %v367 = vunpack.c.l.b16 %v71
    %v368 = vunpack.c.l.b16 %v72
    %v369 = vunpack.c.l.b16 %v73
    %v370 = vunpack.c.l.b16 %v74
    %v371 = vunpack.c.l.b16 %v75
    %v372 = vunpack.c.l.b16 %v76
    %v373 = vunpack.c.l.b16 %v77
    %v374 = vunpack.c.l.b16 %v78
    %v375 = vunpack.c.l.b16 %v79
    %v376 = vunpack.c.l.b16 %v80
    %v377 = vunpack.c.l.b16 %v81
    %v378 = vunpack.c.l.b16 %v82
    %v379 = vunpack.c.l.b16 %v83
    %v380 = vunpack.c.l.b16 %v84
    %v381 = vunpack.c.l.b16 %v85
    %v382 = vunpack.c.l.b16 %v86
    %v383 = vunpack.c.l.b16 %v87
    %v384 = vunpack.c.l.b16 %v88
    %v385 = vunpack.c.l.b16 %v89
    %v386 = vunpack.c.l.b16 %v90
    %v387 = vunpack.c.l.b16 %v91
    %v388 = vunpack.c.l.b16 %v92
    %v389 = vunpack.c.l.b16 %v93
    %v390 = vunpack.c.l.b16 %v94
    %v391 = vunpack.c.l.b16 %v95
    %v392 = vunpack.c.l.b16 %v96
    %v393 = vunpack.c.l.b16 %v97
    %v394 = vunpack.c.l.b16 %v98
    %v395 = vunpack.c.l.b16 %v99
    %v396 = vunpack.c.l.b16 %v100
    %v397 = vunpack.c.l.b16 %v101
    %v398 = vunpack.c.l.b16 %v102
    %v399 = vunpack.c.l.b16 %v103
    %v400 = vunpack.c.l.b16 %v104
    %v401 = vunpack.c.l.b16 %v105
    %v402 = vunpack.c.l.b16 %v106
    %v403 = vunpack.c.l.b16 %v107
    %v404 = vunpack.c.l.b16 %v108
    %v405 = vunpack.c.l.b16 %v109
    %v406 = vunpack.c.l.b16 %v110
    %v407 = vunpack.c.l.b16 %v111
    %v408 = vunpack.c.l.b16 %v112
    %v409 = vunpack.c.l.b16 %v113
    %v410 = vunpack.c.l.b16 %v114
    %v411 = vunpack.c.l.b16 %v115
    %v412 = vunpack.c.l.b16 %v116
    %v413 = vunpack.c.l.b16 %v117
    %v414 = vunpack.c.l.b16 %v118
    %v415 = vunpack.c.l.b16 %v119
    %v416 = vunpack.c.l.b16 %v120
    %v417 = vunpack.c.l.b16 %v121
    %v418 = vunpack.c.l.b16 %v122
    %v419 = vunpack.c.l.b16 %v123
    %v420 = vunpack.c.l.b16 %v124
    %v421 = vunpack.c.l.b16 %v125
    %v422 = vunpack.c.l.b16 %v126
    %v423 = vunpack.c.l.b16 %v127
    %v424 = vunpack.c.l.b16 %v128
    %v425 = vunpack.c.l.b16 %v129
    %v426 = vunpack.c.l.b16 %v130
    %v427 = vunpack.c.l.b16 %v131
    %v428 = vunpack.c.l.b16 %v132
    %v429 = vunpack.c.l.b16 %v133
    %v430 = vunpack.c.l.b16 %v134
    %v431 = vunpack.c.l.b16 %v135
    %v432 = vunpack.c.l.b16 %v136
    %v433 = vunpack.c.l.b16 %v137
    %v434 = vunpack.c.l.b16 %v138
    %v435 = vunpack.c.l.b16 %v139
    %v436 = vunpack.c.l.b16 %v140
    %v437 = vunpack.c.l.b16 %v141
    %v438 = vunpack.c.l.b16 %v142
    %v439 = vunpack.c.l.b16 %v143
    %v440 = vunpack.c.l.b16 %v144
    %v441 = vunpack.c.l.b16 %v145
    %v442 = vunpack.c.l.b16 %v146
    %v443 = vunpack.c.l.b16 %v147
    %v444 = vunpack.c.l.b16 %v148
    %v445 = vunpack.c.l.b16 %v149
    %v446 = vunpack.c.l.b16 %v150
    %v447 = vunpack.c.l.b16 %v151
    %v448 = vunpack.c.l.b16 %v152
    %v449 = vunpack.c.l.b16 %v153
    %v450 = vunpack.c.l.b16 %v154
    %v451 = vunpack.c.l.b16 %v155
    %v452 = vunpack.c.l.b16 %v156
    %v453 = vunpack.c.l.b16 %v157
    %v454 = vunpack.c.l.b16 %v158
    %v455 = vunpack.c.l.b16 %v159
    %v456 = vunpack.c.l.b16 %v160
    %v457 = vunpack.c.l.b16 %v161
    %v458 = vunpack.c.l.b16 %v162
    %v459 = vunpack.c.l.b16 %v163
    %v460 = vunpack.c.l.b16 %v164
    %v461 = vunpack.c.l.b16 %v165
    %v462 = vunpack.c.l.b16 %v166
    %v463 = vunpack.c.l.b16 %v167
    %v464 = vunpack.c.l.b16 %v168
    %v465 = vunpack.c.l.b16 %v169
    %v466 = vunpack.c.l.b16 %v170
    %v467 = vunpack.c.l.b16 %v171
    %v468 = vunpack.c.l.b16 %v172
    %v469 = vpack.c.b16 %v342, %v341
    %v470 = vpack.c.b16 %v344, %v343
    %v471 = vpack.c.b16 %v346, %v345
    %v472 = vpack.c.b16 %v348, %v347
    %v473 = vpack.c.b16 %v350, %v349
    %v474 = vpack.c.b16 %v352, %v351
    %v475 = vpack.c.b16 %v354, %v353
    %v476 = vpack.c.b16 %v356, %v355
    %v477 = vpack.c.b16 %v358, %v357
    %v478 = vpack.c.b16 %v360, %v359
    %v479 = vpack.c.b16 %v362, %v361
    %v480 = vpack.c.b16 %v364, %v363
    %v481 = vpack.c.b16 %v366, %v365
    %v482 = vpack.c.b16 %v368, %v367
    %v483 = vpack.c.b16 %v370, %v369
    %v484 = vpack.c.b16 %v372, %v371
    %v485 = vpack.c.b16 %v374, %v373
    %v486 = vpack.c.b16 %v376, %v375
    %v487 = vpack.c.b16 %v378, %v377
    %v488 = vpack.c.b16 %v380, %v379
    %v489 = vpack.c.b16 %v382, %v381
    %v490 = vpack.c.b16 %v384, %v383
    %v491 = vpack.c.b16 %v386, %v385
    %v492 = vpack.c.b16 %v388, %v387
    %v493 = vpack.c.b16 %v390, %v389
    %v494 = vpack.c.b16 %v392, %v391
    %v495 = vpack.c.b16 %v394, %v393
    %v496 = vpack.c.b16 %v396, %v395
    %v497 = vpack.c.b16 %v398, %v397
    %v498 = vpack.c.b16 %v400, %v399
    %v499 = vpack.c.b16 %v402, %v401
    %v500 = vpack.c.b16 %v404, %v403
    %v501 = vpack.c.b16 %v406, %v405
    %v502 = vpack.c.b16 %v408, %v407
    %v503 = vpack.c.b16 %v410, %v409
    %v504 = vpack.c.b16 %v412, %v411
    %v505 = vpack.c.b16 %v414, %v413
    %v506 = vpack.c.b16 %v416, %v415
    %v507 = vpack.c.b16 %v418, %v417
    %v508 = vpack.c.b16 %v420, %v419
    %v509 = vpack.c.b16 %v422, %v421
    %v510 = vpack.c.b16 %v424, %v423
    %v511 = vpack.c.b16 %v426, %v425
    %v512 = vpack.c.b16 %v428, %v427
    %v513 = vpack.c.b16 %v430, %v429
    %v514 = vpack.c.b16 %v432, %v431
    %v515 = vpack.c.b16 %v434, %v433
    %v516 = vpack.c.b16 %v436, %v435
    %v517 = vpack.c.b16 %v438, %v437
    %v518 = vpack.c.b16 %v440, %v439
    %v519 = vpack.c.b16 %v442, %v441
    %v520 = vpack.c.b16 %v444, %v443
    %v521 = vpack.c.b16 %v446, %v445
    %v522 = vpack.c.b16 %v448, %v447
    %v523 = vpack.c.b16 %v450, %v449
    %v524 = vpack.c.b16 %v452, %v451
    %v525 = vpack.c.b16 %v454, %v453
    %v526 = vpack.c.b16 %v456, %v455
    %v527 = vpack.c.b16 %v458, %v457
    %v528 = vpack.c.b16 %v460, %v459
    %v529 = vpack.c.b16 %v462, %v461
    %v530 = vpack.c.b16 %v464, %v463
    %v531 = vpack.c.b16 %v466, %v465
    %v532 = vpack.c.b16 %v468, %v467
    %597 = vmatprep.subr.bf16.mxu0 0
    %598 = vmatpush1.bf16.msra.mxu0 %v469
    %599 = vmatprep.subr.bf16.mxu0 0
    %600 = vmatpush1.bf16.msra.mxu0 %v470
    %601 = vmatprep.subr.bf16.mxu0 0
    %602 = vmatpush1.bf16.msra.mxu0 %v471
    %603 = vmatprep.subr.bf16.mxu0 0
    %604 = vmatpush1.bf16.msra.mxu0 %v472
    %605 = vmatprep.subr.bf16.mxu0 0
    %606 = vmatpush1.bf16.msra.mxu0 %v473
    %607 = vmatprep.subr.bf16.mxu0 0
    %608 = vmatpush1.bf16.msra.mxu0 %v474
    %609 = vmatprep.subr.bf16.mxu0 0
    %610 = vmatpush1.bf16.msra.mxu0 %v475
    %611 = vmatprep.subr.bf16.mxu0 0
    %612 = vmatpush1.bf16.msra.mxu0 %v476
    %613 = vmatprep.subr.bf16.mxu0 0
    %614 = vmatpush1.bf16.msra.mxu0 %v477
    %615 = vmatprep.subr.bf16.mxu0 0
    %616 = vmatpush1.bf16.msra.mxu0 %v478
    %617 = vmatprep.subr.bf16.mxu0 0
    %618 = vmatpush1.bf16.msra.mxu0 %v479
    %619 = vmatprep.subr.bf16.mxu0 0
    %620 = vmatpush1.bf16.msra.mxu0 %v480
    %621 = vmatprep.subr.bf16.mxu0 0
    %622 = vmatpush1.bf16.msra.mxu0 %v481
    %623 = vmatprep.subr.bf16.mxu0 0
    %624 = vmatpush1.bf16.msra.mxu0 %v482
    %625 = vmatprep.subr.bf16.mxu0 0
    %626 = vmatpush1.bf16.msra.mxu0 %v483
    %627 = vmatprep.subr.bf16.mxu0 0
    %628 = vmatpush1.bf16.msra.mxu0 %v484
    %629 = vmatprep.mubr.bf16.mxu0 %v198
    %630 = vmatmul.mubr.bf16.gmra.mrb[0].mxu0 %v197
    %v631 = vpop.f32.mrb[0].mxu0
    %v632 = vadd.f32 0.0, %v631
    %v633 = vpop.f32.mrb[0].mxu0
    %v634 = vpop.f32.mrb[0].mxu0
    %v635 = vadd.f32 0.0, %v634
    %v636 = vpop.f32.mrb[0].mxu0
    %637 = vdwg.mxu0
    %638 = vmatprep.subr.bf16.mxu0 0
    %639 = vmatpush1.bf16.msra.mxu0 %v485
    %640 = vmatprep.subr.bf16.mxu0 0
    %641 = vmatpush1.bf16.msra.mxu0 %v486
    %642 = vmatprep.subr.bf16.mxu0 0
    %643 = vmatpush1.bf16.msra.mxu0 %v487
    %644 = vmatprep.subr.bf16.mxu0 0
    %645 = vmatpush1.bf16.msra.mxu0 %v488
    %646 = vmatprep.subr.bf16.mxu0 0
    %647 = vmatpush1.bf16.msra.mxu0 %v489
    %648 = vmatprep.subr.bf16.mxu0 0
    %649 = vmatpush1.bf16.msra.mxu0 %v490
    %650 = vmatprep.subr.bf16.mxu0 0
    %651 = vmatpush1.bf16.msra.mxu0 %v491
    %652 = vmatprep.subr.bf16.mxu0 0
    %653 = vmatpush1.bf16.msra.mxu0 %v492
    %654 = vmatprep.subr.bf16.mxu0 0
    %655 = vmatpush1.bf16.msra.mxu0 %v493
    %656 = vmatprep.subr.bf16.mxu0 0
    %657 = vmatpush1.bf16.msra.mxu0 %v494
    %658 = vmatprep.subr.bf16.mxu0 0
    %659 = vmatpush1.bf16.msra.mxu0 %v495
    %660 = vmatprep.subr.bf16.mxu0 0
    %661 = vmatpush1.bf16.msra.mxu0 %v496
    %662 = vmatprep.subr.bf16.mxu0 0
    %663 = vmatpush1.bf16.msra.mxu0 %v497
    %664 = vmatprep.subr.bf16.mxu0 0
    %665 = vmatpush1.bf16.msra.mxu0 %v498
    %666 = vmatprep.subr.bf16.mxu0 0
    %667 = vmatpush1.bf16.msra.mxu0 %v499
    %668 = vmatprep.subr.bf16.mxu0 0
    %669 = vmatpush1.bf16.msra.mxu0 %v500
    %670 = vmatprep.mubr.bf16.mxu0 %v200
    %671 = vmatmul.mubr.bf16.gmra.mrb[0].mxu0 %v199
    %v672 = vpop.f32.mrb[0].mxu0
    %v673 = vadd.f32 %v632, %v672
    %v674 = vpop.f32.mrb[0].mxu0
    %v675 = vpop.f32.mrb[0].mxu0
    %v676 = vadd.f32 %v635, %v675
    %v677 = vpop.f32.mrb[0].mxu0
    %678 = vdwg.mxu0
    %679 = vmatprep.subr.bf16.mxu0 0
    %680 = vmatpush1.bf16.msra.mxu0 %v501
    %681 = vmatprep.subr.bf16.mxu0 0
    %682 = vmatpush1.bf16.msra.mxu0 %v502
    %683 = vmatprep.subr.bf16.mxu0 0
    %684 = vmatpush1.bf16.msra.mxu0 %v503
    %685 = vmatprep.subr.bf16.mxu0 0
    %686 = vmatpush1.bf16.msra.mxu0 %v504
    %687 = vmatprep.subr.bf16.mxu0 0
    %688 = vmatpush1.bf16.msra.mxu0 %v505
    %689 = vmatprep.subr.bf16.mxu0 0
    %690 = vmatpush1.bf16.msra.mxu0 %v506
    %691 = vmatprep.subr.bf16.mxu0 0
    %692 = vmatpush1.bf16.msra.mxu0 %v507
    %693 = vmatprep.subr.bf16.mxu0 0
    %694 = vmatpush1.bf16.msra.mxu0 %v508
    %695 = vmatprep.subr.bf16.mxu0 0
    %696 = vmatpush1.bf16.msra.mxu0 %v509
    %697 = vmatprep.subr.bf16.mxu0 0
    %698 = vmatpush1.bf16.msra.mxu0 %v510
    %699 = vmatprep.subr.bf16.mxu0 0
    %700 = vmatpush1.bf16.msra.mxu0 %v511
    %701 = vmatprep.subr.bf16.mxu0 0
    %702 = vmatpush1.bf16.msra.mxu0 %v512
    %703 = vmatprep.subr.bf16.mxu0 0
    %704 = vmatpush1.bf16.msra.mxu0 %v513
    %705 = vmatprep.subr.bf16.mxu0 0
    %706 = vmatpush1.bf16.msra.mxu0 %v514
    %707 = vmatprep.subr.bf16.mxu0 0
    %708 = vmatpush1.bf16.msra.mxu0 %v515
    %709 = vmatprep.subr.bf16.mxu0 0
    %710 = vmatpush1.bf16.msra.mxu0 %v516
    %711 = vmatprep.mubr.bf16.mxu0 %v202
    %712 = vmatmul.mubr.bf16.gmra.mrb[0].mxu0 %v201
    %v713 = vpop.f32.mrb[0].mxu0
    %v714 = vadd.f32 %v673, %v713
    %v715 = vpop.f32.mrb[0].mxu0
    %v716 = vpop.f32.mrb[0].mxu0
    %v717 = vadd.f32 %v676, %v716
    %v718 = vpop.f32.mrb[0].mxu0
    %719 = vdwg.mxu0
    %720 = vmatprep.subr.bf16.mxu0 0
    %721 = vmatpush1.bf16.msra.mxu0 %v517
    %722 = vmatprep.subr.bf16.mxu0 0
    %723 = vmatpush1.bf16.msra.mxu0 %v518
    %724 = vmatprep.subr.bf16.mxu0 0
    %725 = vmatpush1.bf16.msra.mxu0 %v519
    %726 = vmatprep.subr.bf16.mxu0 0
    %727 = vmatpush1.bf16.msra.mxu0 %v520
    %728 = vmatprep.subr.bf16.mxu0 0
    %729 = vmatpush1.bf16.msra.mxu0 %v521
    %730 = vmatprep.subr.bf16.mxu0 0
    %731 = vmatpush1.bf16.msra.mxu0 %v522
    %732 = vmatprep.subr.bf16.mxu0 0
    %733 = vmatpush1.bf16.msra.mxu0 %v523
    %734 = vmatprep.subr.bf16.mxu0 0
    %735 = vmatpush1.bf16.msra.mxu0 %v524
    %736 = vmatprep.subr.bf16.mxu0 0
    %737 = vmatpush1.bf16.msra.mxu0 %v525
    %738 = vmatprep.subr.bf16.mxu0 0
    %739 = vmatpush1.bf16.msra.mxu0 %v526
    %740 = vmatprep.subr.bf16.mxu0 0
    %741 = vmatpush1.bf16.msra.mxu0 %v527
    %742 = vmatprep.subr.bf16.mxu0 0
    %743 = vmatpush1.bf16.msra.mxu0 %v528
    %744 = vmatprep.subr.bf16.mxu0 0
    %745 = vmatpush1.bf16.msra.mxu0 %v529
    %746 = vmatprep.subr.bf16.mxu0 0
    %747 = vmatpush1.bf16.msra.mxu0 %v530
    %748 = vmatprep.subr.bf16.mxu0 0
    %749 = vmatpush1.bf16.msra.mxu0 %v531
    %750 = vmatprep.subr.bf16.mxu0 0
    %751 = vmatpush1.bf16.msra.mxu0 %v532
    %752 = vmatprep.mubr.bf16.mxu0 %v204
    %753 = vmatmul.mubr.bf16.gmra.mrb[0].mxu0 %v203
    %v754 = vpop.f32.mrb[0].mxu0
    %v755 = vadd.f32 %v714, %v754
    %v756 = vpop.f32.mrb[0].mxu0
    %v757 = vpop.f32.mrb[0].mxu0
    %v758 = vadd.f32 %v717, %v757
    %v759 = vpop.f32.mrb[0].mxu0
    %760 = vdwg.mxu0
    %v761 = vadd.f32 %v35, %v755
    %v762 = vadd.f32 %v36, %v758
    %vm763 = vcmask 195584
    %764 = vst.msk [vmem:[#allocation2] sm:$0xff] %vm763, %v761
    %765 = vst.msk [vmem:[#allocation2 + $0x8] sm:$0xff] %vm763, %v762
    // Predicated region
    $region34: #{tpu_custom_call.1} parent=1 // pred_check
      %p766 = pneg %p28
    $region35: #{tpu_custom_call.1} parent=1 // pred_check_branch
      %768 = sbr.rel (%p766) target = $region37
    $region36: #{tpu_custom_call.1} parent=1 // pred_region
      %v769 = vld [vmem:[#allocation2] sm:$0xff]
      %v770 = vld [vmem:[#allocation2 + $0x8] sm:$0xff]
      %v771 = vld [vmem:[%s2] sm:$0x1]
      %v773 = vlaneseq
      %v774 = vshrl.u32 %v773, 7
      %v775 = vsub.s32 0, %v774
      %v776 = vrot.slane %v771, %v775
      %v778 = vadd.f32 %v769, %v776
      %v779 = vadd.f32 %v770, %v776
      %v780 = vmax.f32 %v778, 0.0
      %v781 = vmax.f32 %v779, 0.0
      %v782 = vlaneseq
      %v783 = vshrl.u32 %v782, 7
      %v784 = vadd.s32 %v783, 8
      %vm785 = vcmp.lt.s32.totalorder %v783, 2
      %vm786 = vcmp.lt.s32.totalorder %v784, 2
      %v787 = vsel %vm785, 1, 0
      %v788 = vsel %vm786, 1, 0
      %v789 = vcvt.s32.f32 %v787
      %v790 = vcvt.s32.f32 %v788
      %v791 = vmul.f32 %v780, %v789
      %v792 = vmul.f32 %v781, %v790
      %v793 = vsel %vm763, %v791, 0.0
      %v794 = vsel %vm763, %v792, 0.0
      %v795 = vadd.f32 %v793, %v794
      %v796 = vrot.slane %v795, 4
      %v797 = vadd.f32 %v795, %v796
      %v798 = vrot.slane %v797, 2
      %v799 = vadd.f32 %v797, %v798
      %v800 = vrot.slane %v799, 1
      %v801 = vadd.f32 %v799, %v800
      %v802 = vmul.f32 %v801, 0.5
      %v803 = vsub.f32 %v780, %v802
      %v804 = vsub.f32 %v781, %v802
      %v805 = vmul.f32 %v803, %v789
      %v806 = vmul.f32 %v804, %v790
      %v807 = vmul.f32 %v805, %v805
      %v808 = vmul.f32 %v806, %v806
      %v809 = vsel %vm763, %v807, 0.0
      %v810 = vsel %vm763, %v808, 0.0
      %v811 = vadd.f32 %v809, %v810
      %v812 = vrot.slane %v811, 4
      %v813 = vadd.f32 %v811, %v812
      %v814 = vrot.slane %v813, 2
      %v815 = vadd.f32 %v813, %v814
      %v816 = vrot.slane %v815, 1
      %v817 = vadd.f32 %v815, %v816
      %v818 = vmul.f32 %v817, 0.5
      %v819 = vadd.f32 %v818, 1e-05
      %v820 = vrsqrt.pop %v819
      %v821 = vmul.f32 %v803, %v820
      %v822 = vmul.f32 %v804, %v820
      %v823 = vld [vmem:[%s3] sm:$0x1]
      %v825 = vlaneseq
      %v826 = vshrl.u32 %v825, 7
      %v827 = vsub.s32 0, %v826
      %v828 = vrot.slane %v823, %v827
      %v830 = vmul.f32 %v821, %v828
      %v831 = vmul.f32 %v822, %v828
      %v832 = vld [vmem:[%s4] sm:$0x1]
      %v834 = vlaneseq
      %v835 = vshrl.u32 %v834, 7
      %v836 = vsub.s32 0, %v835
      %v837 = vrot.slane %v832, %v836
      %v839 = vadd.f32 %v830, %v837
      %v840 = vadd.f32 %v831, %v837
      %v841 = vld [vmem:[%s5] sm:$0xff]
      %v842 = vld [vmem:[%s5 + $0x8] sm:$0xff]
      %v843 = vld [vmem:[%s5 + $0x10] sm:$0xff]
      %v844 = vld [vmem:[%s6] sm:$0x1]
      %v846 = vlaneseq
      %v847 = vshrl.u32 %v846, 7
      %v848 = vsub.s32 0, %v847
      %v849 = vrot.slane %v844, %v848
      %v852 = vsel %vm763, %v839, 0
      %v855 = vsel %vm763, %v840, 0
      %857 = vmatprep.subr.mxu0 0.0
      %858 = vmatpush1.msra.mxu0 %v841
      %859 = vmatprep.subr.mxu0 0.0
      %860 = vmatpush1.msra.mxu0 %v842
      %861 = vmatprep.subr.mxu0 0.0
      %862 = vmatpush1.msra.mxu0 %v843
      %863 = vmatprep.subr.mxu0 0.0
      %864 = vmatpush1.msra.mxu0 0.0
      %865 = vmatprep.subr.mxu0 0.0
      %866 = vmatpush1.msra.mxu0 0.0
      %867 = vmatprep.subr.mxu0 0.0
      %868 = vmatpush1.msra.mxu0 0.0
      %869 = vmatprep.subr.mxu0 0.0
      %870 = vmatpush1.msra.mxu0 0.0
      %871 = vmatprep.subr.mxu0 0.0
      %872 = vmatpush1.msra.mxu0 0.0
      %873 = vmatprep.subr.mxu0 0.0
      %874 = vmatpush1.msra.mxu0 0.0
      %875 = vmatprep.subr.mxu0 0.0
      %876 = vmatpush1.msra.mxu0 0.0
      %877 = vmatprep.subr.mxu0 0.0
      %878 = vmatpush1.msra.mxu0 0.0
      %879 = vmatprep.subr.mxu0 0.0
      %880 = vmatpush1.msra.mxu0 0.0
      %881 = vmatprep.subr.mxu0 0.0
      %882 = vmatpush1.msra.mxu0 0.0
      %883 = vmatprep.subr.mxu0 0.0
      %884 = vmatpush1.msra.mxu0 0.0
      %885 = vmatprep.subr.mxu0 0.0
      %886 = vmatpush1.msra.mxu0 0.0
      %887 = vmatprep.subr.mxu0 0.0
      %888 = vmatpush1.msra.mxu0 0.0
      %889 = vmatprep.subr.mxu0 0.0
      %890 = vmatpush1.msra.mxu0 0.0
      %891 = vmatprep.subr.mxu0 0.0
      %892 = vmatpush1.msra.mxu0 0.0
      %893 = vmatprep.subr.mxu0 0.0
      %894 = vmatpush1.msra.mxu0 0.0
      %895 = vmatprep.subr.mxu0 0.0
      %896 = vmatpush1.msra.mxu0 0.0
      %897 = vmatprep.subr.mxu0 0.0
      %898 = vmatpush1.msra.mxu0 0.0
      %899 = vmatprep.subr.mxu0 0.0
      %900 = vmatpush1.msra.mxu0 0.0
      %901 = vmatprep.subr.mxu0 0.0
      %902 = vmatpush1.msra.mxu0 0.0
      %903 = vmatprep.subr.mxu0 0.0
      %904 = vmatpush1.msra.mxu0 0.0
      %905 = vmatprep.subr.mxu0 0.0
      %906 = vmatpush1.msra.mxu0 0.0
      %907 = vmatprep.subr.mxu0 0.0
      %908 = vmatpush1.msra.mxu0 0.0
      %909 = vmatprep.subr.mxu0 0.0
      %910 = vmatpush1.msra.mxu0 0.0
      %911 = vmatprep.subr.mxu0 0.0
      %912 = vmatpush1.msra.mxu0 0.0
      %913 = vmatprep.subr.mxu0 0.0
      %914 = vmatpush1.msra.mxu0 0.0
      %915 = vmatprep.subr.mxu0 0.0
      %916 = vmatpush1.msra.mxu0 0.0
      %917 = vmatprep.subr.mxu0 0.0
      %918 = vmatpush1.msra.mxu0 0.0
      %919 = vmatprep.subr.mxu0 0.0
      %920 = vmatpush1.msra.mxu0 0.0
      %921 = vmatprep.mubr.f32.mxu0 0.0
      %922 = vmatmul.mubr.f32.gmra.mrb[0].mxu0 %v852
      %v923 = vpop.f32.mrb[0].mxu0
      %v924 = vadd.f32 %v849, %v923
      %v925 = vpop.f32.mrb[0].mxu0
      %926 = vmatprep.mubr.f32.mxu0 0.0
      %927 = vmatmul.mubr.f32.gmra.mrb[0].mxu0 %v855
      %v928 = vpop.f32.mrb[0].mxu0
      %v929 = vadd.f32 %v849, %v928
      %v930 = vpop.f32.mrb[0].mxu0
      %931 = vdwg.mxu0
      %932 = vst [vmem:[#allocation3] sm:$0xff] %v924
      %933 = vst [vmem:[#allocation3 + $0x8] sm:$0xff] %v929
    $region37: #{tpu_custom_call.1} parent=1 // pred_fallthru
      _
    // Predicated region
    $region38: #{tpu_custom_call.1} parent=1 // pred_check
      _
    $region39: #{tpu_custom_call.1} parent=1 // pred_check_branch
      %935 = sbr.rel (0) target = $region41
    $region40: #{tpu_custom_call.1} parent=1 // pred_region
      %s937 = ssub.s32 256, 256
      %938 = vsyncadd [#allocation4], %s937
      %s939 = sshll.u32 [#allocation3], 4
      %s940 = int_to_ptr.vmem [resolvable:$true] %s939
      %945 = dma.vmem_to_hbm [thread:$0]  %s940, 256, %s7, [#allocation4], 128, 128, 8
    $region41: #{tpu_custom_call.1} parent=1 // pred_fallthru
      _
    // Predicated region
    $region42: #{tpu_custom_call.1} parent=1 // pred_check
      _
    $region43: #{tpu_custom_call.1} parent=1 // pred_check_branch
      %947 = sbr.rel (0) target = $region45
    $region44: #{tpu_custom_call.1} parent=1 // pred_region
      %948 = dma.done [#allocation4], 256
    $region45: #{tpu_custom_call.1} parent=1 // pred_fallthru
      _
    %949 = vsyncpa [#allocation4], 1

</llo_original>
